<compile_context>
chip_gen: v7x
topology: tpu7x:2x2x1
jax: 0.10.0
libtpu: 0.0.40
codegen_flags: <defaults>
</compile_context>

<pallas_src>
import functools

import numpy as np
import jax
import jax.numpy as jnp
from jax.experimental import pallas as pl
from jax.experimental.pallas import tpu as pltpu


def _round_up(x, m):
    return ((x + m - 1) // m) * m


def _ce_rowloss_kernel(logits_ref, tgt_ref, loss_ref, m_ref, l_ref, t_ref, *,
                       n_rows, n_cols):
    """Online-LSE cross entropy.  Grid = (row tiles [parallel], class tiles [arbitrary])."""
    i = pl.program_id(0)            # row-tile index
    j = pl.program_id(1)            # class-tile index (innermost, reduction)
    nj = pl.num_programs(1)
    tm, tc = logits_ref.shape

    @pl.when(j == 0)
    def _():
        m_ref[...] = jnp.full_like(m_ref, -jnp.inf)
        l_ref[...] = jnp.zeros_like(l_ref)
        t_ref[...] = jnp.zeros_like(t_ref)

    # Load block, upcast (bf16 inputs supported), mask class padding in-kernel.
    x = logits_ref[...].astype(jnp.float32)                       # (tm, tc)
    col = j * tc + jax.lax.broadcasted_iota(jnp.int32, (tm, tc), 1)
    x = jnp.where(col < n_cols, x, -1e30)

    tgt = tgt_ref[...]                                            # (tm, 1) int32, -1 == pad row
    # Target logit contribution from this class tile (0 if target not in tile).
    t_ref[...] += jnp.sum(jnp.where(col == tgt, x, 0.0), axis=-1, keepdims=True)

    # Online log-sum-exp update.
    m_prev = m_ref[...]
    m_new = jnp.maximum(m_prev, jnp.max(x, axis=-1, keepdims=True))
    l_ref[...] = (l_ref[...] * jnp.exp(m_prev - m_new)
                  + jnp.sum(jnp.exp(x - m_new), axis=-1, keepdims=True))
    m_ref[...] = m_new

    @pl.when(j == nj - 1)
    def _():
        lse = m_ref[...] + jnp.log(l_ref[...])
        row = i * tm + jax.lax.broadcasted_iota(jnp.int32, (tm, 1), 0)
        valid = jnp.logical_and(tgt >= 0, row < n_rows)
        loss_ref[...] = jnp.where(valid, lse - t_ref[...], 0.0)


def cross_entropy_sum(logits, target, *, tm=512, tc=2048):
    """sum_i CE(logits[i], target[i]) over rows with target[i] >= 0.

    logits: (R, C) float array (f32 or bf16), passed raw (no host padding).
    target: (R,)  int array; rows with target == -1 are ignored.
    """
    logits = jnp.asarray(logits)
    target = jnp.asarray(target, jnp.int32).reshape(-1, 1)
    R, C = logits.shape
    assert target.shape[0] == R

    tm = min(tm, _round_up(R, 8))        # row tile   (sublane multiple of 8)
    tc = min(tc, _round_up(C, 128))      # class tile (lane multiple of 128)
    grid = (pl.cdiv(R, tm), pl.cdiv(C, tc))

    per_row_loss = pl.pallas_call(
        functools.partial(_ce_rowloss_kernel, n_rows=R, n_cols=C),
        out_shape=jax.ShapeDtypeStruct((grid[0] * tm, 1), jnp.float32),
        grid=grid,
        in_specs=[
            pl.BlockSpec((tm, tc), lambda i, j: (i, j)),   # logits tile
            pl.BlockSpec((tm, 1), lambda i, j: (i, 0)),    # targets (resident over j)
        ],
        out_specs=pl.BlockSpec((tm, 1), lambda i, j: (i, 0)),
        scratch_shapes=[
            pltpu.VMEM((tm, 1), jnp.float32),   # running max  m
            pltpu.VMEM((tm, 1), jnp.float32),   # running sum-exp  l
            pltpu.VMEM((tm, 1), jnp.float32),   # accumulated target logit
        ],
        compiler_params=pltpu.CompilerParams(
            dimension_semantics=("parallel", "arbitrary")),
    )(logits, target)

    # Pad rows contribute exactly 0; reduce the tiny per-row vector in XLA.
    return jnp.sum(per_row_loss)


class AdaptiveLossPallas:
    """JAX/Pallas port of the PyTorch AdaptiveLoss module."""

    def __init__(self, cutoff):
        self.cutoff = cutoff

    def remap_target(self, target):
        # Host-side (numpy): cluster membership produces data-dependent shapes.
        target = np.asarray(target).copy()
        new_target = [target.copy()]
        for i in range(len(self.cutoff) - 1):
            mask = (target >= self.cutoff[i]) & (target < self.cutoff[i + 1])
            new_target[0][mask] = self.cutoff[0] + i
            if mask.sum() > 0:
                new_target.append(target[mask] - self.cutoff[i])
            else:
                new_target.append(None)
        return new_target

    def forward(self, inputs, target):
        batch_size = inputs[0].shape[0]
        targets = self.remap_target(target)
        output = jnp.float32(0.0)
        for i in range(len(inputs)):
            if inputs[i] is None or targets[i] is None:
                continue
            tgt_i = np.asarray(targets[i], dtype=np.int32)
            # Strict upper bound (original used `<=`, which silently lets an
            # out-of-range target corrupt the loss).
            assert tgt_i.min() >= 0 and tgt_i.max() < inputs[i].shape[1]

            logits_i = jnp.asarray(inputs[i])
            n_i, c_i = logits_i.shape
            # Bucket cluster rows to batch_size so every pallas_call sees a
            # static shape (one compile per cluster width, reused across steps).
            if n_i < batch_size:
                logits_i = (jnp.zeros((batch_size, c_i), logits_i.dtype)
                            .at[:n_i].set(logits_i))
            tgt_b = np.full((logits_i.shape[0],), -1, dtype=np.int32)
            tgt_b[:n_i] = tgt_i

            output = output + cross_entropy_sum(logits_i, jnp.asarray(tgt_b))
        output = output / batch_size
        return output


def _ref_ce_sum(logits, target):
    logits = np.asarray(logits, np.float64)
    target = np.asarray(target)
    m = logits.max(axis=-1, keepdims=True)
    lse = m[:, 0] + np.log(np.exp(logits - m).sum(axis=-1))
    return float((lse - logits[np.arange(len(target)), target]).sum())


if __name__ == "__main__":
    # Small adaptive-softmax setup: vocab of 32 split as head [0,8) + 2 clusters.
    cutoff = [8, 16, 32]
    n_clusters = len(cutoff) - 1
    batch = 16
    head_classes = cutoff[0] + n_clusters  # 10

    key = jax.random.PRNGKey(0)
    k_t, k_h, k_c0, k_c1 = jax.random.split(key, 4)

    target_np = np.asarray(
        jax.random.randint(k_t, (batch,), 0, cutoff[-1], dtype=jnp.int32))

    # Build the adaptive-softmax-style input list (deterministic, synthetic).
    head_logits = jax.random.normal(k_h, (batch, head_classes), jnp.float32)
    inputs = [head_logits]
    cluster_keys = [k_c0, k_c1]
    for i in range(n_clusters):
        mask = (target_np >= cutoff[i]) & (target_np < cutoff[i + 1])
        n_i = int(mask.sum())
        c_i = cutoff[i + 1] - cutoff[i]
        if n_i > 0:
            inputs.append(
                jax.random.normal(cluster_keys[i], (n_i, c_i), jnp.float32))
        else:
            inputs.append(None)

    loss_mod = AdaptiveLossPallas(cutoff)
    out = loss_mod.forward(inputs, target_np)
    out = jax.block_until_ready(out)

    # Pure-numpy reference for correctness check.
    tgts = loss_mod.remap_target(target_np)
    ref = 0.0
    for i in range(len(inputs)):
        if inputs[i] is not None and tgts[i] is not None:
            ref += _ref_ce_sum(inputs[i], tgts[i])
    ref /= batch

    np.testing.assert_allclose(float(out), ref, rtol=1e-5, atol=1e-5)
    print("KERNEL_OK")
</pallas_src>

<mosaic_0001>
module attributes {stable_mosaic.version = 11 : i64} {
  func.func @_ce_rowloss_kernel(%arg0: i32, %arg1: i32, %arg2: memref<16x128xf32, #tpu.memory_space<vmem>>, %arg3: memref<16x1xi32, #tpu.memory_space<vmem>>, %arg4: memref<16x1xf32, #tpu.memory_space<vmem>>, %arg5: memref<16x1xf32, #tpu.memory_space<vmem>>, %arg6: memref<16x1xf32, #tpu.memory_space<vmem>>, %arg7: memref<16x1xf32, #tpu.memory_space<vmem>>) attributes {dimension_semantics = [#tpu.dimension_semantics<parallel>, #tpu.dimension_semantics<arbitrary>], iteration_bounds = array<i64: 1, 1>, scalar_prefetch = 0 : i64, scratch_operands = 3 : i64, tpu.core_type = #tpu.core_type<tc>, window_params = [{transform_indices = @transform_0, window_bounds = array<i64: 16, 128>}, {transform_indices = @transform_1, window_bounds = array<i64: 16, 1>}, {transform_indices = @transform_2, window_bounds = array<i64: 16, 1>}]} {
    %c0_i32 = arith.constant 0 : i32
    %0 = arith.cmpi eq, %arg1, %c0_i32 : i32
    %1 = arith.extui %0 : i1 to i32
    %c0_i32_0 = arith.constant 0 : i32
    %2 = arith.cmpi ne, %1, %c0_i32_0 : i32
    scf.if %2 {
      %cst_22 = arith.constant 0xFF800000 : f32
      %41 = vector.broadcast %cst_22 : f32 to vector<16x1xf32>
      %c0_23 = arith.constant 0 : index
      %c0_24 = arith.constant 0 : index
      %42 = vector.load %arg5[%c0_23, %c0_24] : memref<16x1xf32, #tpu.memory_space<vmem>>, vector<16x1xf32>
      tpu.vector_store %arg5[%c0_23, %c0_24], %41 {strides = array<i32>} : memref<16x1xf32, #tpu.memory_space<vmem>>, vector<16x1xf32>,
      %cst_25 = arith.constant 0.000000e+00 : f32
      %43 = vector.broadcast %cst_25 : f32 to vector<16x1xf32>
      %c0_26 = arith.constant 0 : index
      %c0_27 = arith.constant 0 : index
      %44 = vector.load %arg6[%c0_26, %c0_27] : memref<16x1xf32, #tpu.memory_space<vmem>>, vector<16x1xf32>
      tpu.vector_store %arg6[%c0_26, %c0_27], %43 {strides = array<i32>} : memref<16x1xf32, #tpu.memory_space<vmem>>, vector<16x1xf32>,
      %cst_28 = arith.constant 0.000000e+00 : f32
      %45 = vector.broadcast %cst_28 : f32 to vector<16x1xf32>
      %c0_29 = arith.constant 0 : index
      %c0_30 = arith.constant 0 : index
      %46 = vector.load %arg7[%c0_29, %c0_30] : memref<16x1xf32, #tpu.memory_space<vmem>>, vector<16x1xf32>
      tpu.vector_store %arg7[%c0_29, %c0_30], %45 {strides = array<i32>} : memref<16x1xf32, #tpu.memory_space<vmem>>, vector<16x1xf32>,
    } else {
    }
    %c0 = arith.constant 0 : index
    %c0_1 = arith.constant 0 : index
    %3 = vector.load %arg2[%c0, %c0_1] : memref<16x128xf32, #tpu.memory_space<vmem>>, vector<16x128xf32>
    %c128_i32 = arith.constant 128 : i32
    %4 = arith.muli %arg1, %c128_i32 : i32
    %5 = tpu.iota {dimensions = array<i32: 1>} : vector<16x128xi32>
    %6 = vector.broadcast %4 : i32 to vector<16x128xi32>
    %7 = arith.addi %6, %5 : vector<16x128xi32>
    %c10_i32 = arith.constant 10 : i32
    %8 = vector.broadcast %c10_i32 : i32 to vector<16x128xi32>
    %9 = arith.cmpi slt, %7, %8 : vector<16x128xi32>
    %cst = arith.constant -1.000000e+30 : f32
    %10 = vector.broadcast %cst : f32 to vector<16x128xf32>
    %11 = arith.select %9, %3, %10 : vector<16x128xi1>, vector<16x128xf32>
    %c0_2 = arith.constant 0 : index
    %c0_3 = arith.constant 0 : index
    %12 = vector.load %arg3[%c0_2, %c0_3] : memref<16x1xi32, #tpu.memory_space<vmem>>, vector<16x1xi32>
    %c0_4 = arith.constant 0 : index
    %c0_5 = arith.constant 0 : index
    %13 = vector.load %arg7[%c0_4, %c0_5] : memref<16x1xf32, #tpu.memory_space<vmem>>, vector<16x1xf32>
    %14 = vector.broadcast %12 : vector<16x1xi32> to vector<16x128xi32>
    %15 = arith.cmpi eq, %7, %14 : vector<16x128xi32>
    %cst_6 = arith.constant 0.000000e+00 : f32
    %16 = vector.broadcast %cst_6 : f32 to vector<16x128xf32>
    %17 = arith.select %15, %11, %16 : vector<16x128xi1>, vector<16x128xf32>
    %cst_7 = arith.constant dense<0.000000e+00> : vector<16xf32>
    %18 = vector.multi_reduction <add>, %17, %cst_7 [1] : vector<16x128xf32> to vector<16xf32>
    %19 = vector.shape_cast %18 : vector<16xf32> to vector<16x1xf32>
    %20 = arith.addf %13, %19 : vector<16x1xf32>
    %c0_8 = arith.constant 0 : index
    %c0_9 = arith.constant 0 : index
    %21 = vector.load %arg7[%c0_8, %c0_9] : memref<16x1xf32, #tpu.memory_space<vmem>>, vector<16x1xf32>
    tpu.vector_store %arg7[%c0_8, %c0_9], %20 {strides = array<i32>} : memref<16x1xf32, #tpu.memory_space<vmem>>, vector<16x1xf32>,
    %c0_10 = arith.constant 0 : index
    %c0_11 = arith.constant 0 : index
    %22 = vector.load %arg5[%c0_10, %c0_11] : memref<16x1xf32, #tpu.memory_space<vmem>>, vector<16x1xf32>
    %cst_12 = arith.constant dense<0xFF800000> : vector<16xf32>
    %23 = vector.multi_reduction <maximumf>, %11, %cst_12 [1] : vector<16x128xf32> to vector<16xf32>
    %24 = vector.shape_cast %23 : vector<16xf32> to vector<16x1xf32>
    %25 = arith.maximumf %22, %24 : vector<16x1xf32>
    %c0_13 = arith.constant 0 : index
    %c0_14 = arith.constant 0 : index
    %26 = vector.load %arg6[%c0_13, %c0_14] : memref<16x1xf32, #tpu.memory_space<vmem>>, vector<16x1xf32>
    %27 = arith.subf %22, %25 : vector<16x1xf32>
    %28 = math.exp %27 : vector<16x1xf32>
    %29 = arith.mulf %26, %28 : vector<16x1xf32>
    %30 = vector.broadcast %25 : vector<16x1xf32> to vector<16x128xf32>
    %31 = arith.subf %11, %30 : vector<16x128xf32>
    %32 = math.exp %31 : vector<16x128xf32>
    %cst_15 = arith.constant dense<0.000000e+00> : vector<16xf32>
    %33 = vector.multi_reduction <add>, %32, %cst_15 [1] : vector<16x128xf32> to vector<16xf32>
    %34 = vector.shape_cast %33 : vector<16xf32> to vector<16x1xf32>
    %35 = arith.addf %29, %34 : vector<16x1xf32>
    %c0_16 = arith.constant 0 : index
    %c0_17 = arith.constant 0 : index
    %36 = vector.load %arg6[%c0_16, %c0_17] : memref<16x1xf32, #tpu.memory_space<vmem>>, vector<16x1xf32>
    tpu.vector_store %arg6[%c0_16, %c0_17], %35 {strides = array<i32>} : memref<16x1xf32, #tpu.memory_space<vmem>>, vector<16x1xf32>,
    %c0_18 = arith.constant 0 : index
    %c0_19 = arith.constant 0 : index
    %37 = vector.load %arg5[%c0_18, %c0_19] : memref<16x1xf32, #tpu.memory_space<vmem>>, vector<16x1xf32>
    tpu.vector_store %arg5[%c0_18, %c0_19], %25 {strides = array<i32>} : memref<16x1xf32, #tpu.memory_space<vmem>>, vector<16x1xf32>,
    %c0_i32_20 = arith.constant 0 : i32
    %38 = arith.cmpi eq, %arg1, %c0_i32_20 : i32
    %39 = arith.extui %38 : i1 to i32
    %c0_i32_21 = arith.constant 0 : i32
    %40 = arith.cmpi ne, %39, %c0_i32_21 : i32
    scf.if %40 {
      %c0_22 = arith.constant 0 : index
      %c0_23 = arith.constant 0 : index
      %41 = vector.load %arg5[%c0_22, %c0_23] : memref<16x1xf32, #tpu.memory_space<vmem>>, vector<16x1xf32>
      %c0_24 = arith.constant 0 : index
      %c0_25 = arith.constant 0 : index
      %42 = vector.load %arg6[%c0_24, %c0_25] : memref<16x1xf32, #tpu.memory_space<vmem>>, vector<16x1xf32>
      %43 = math.log %42 : vector<16x1xf32>
      %44 = arith.addf %41, %43 : vector<16x1xf32>
      %c16_i32 = arith.constant 16 : i32
      %45 = arith.muli %arg0, %c16_i32 : i32
      %46 = tpu.iota {dimensions = array<i32: 0>} : vector<16x1xi32>
      %47 = vector.broadcast %45 : i32 to vector<16x1xi32>
      %48 = arith.addi %47, %46 : vector<16x1xi32>
      %c0_i32_26 = arith.constant 0 : i32
      %49 = vector.broadcast %c0_i32_26 : i32 to vector<16x1xi32>
      %50 = arith.cmpi sge, %12, %49 : vector<16x1xi32>
      %c16_i32_27 = arith.constant 16 : i32
      %51 = vector.broadcast %c16_i32_27 : i32 to vector<16x1xi32>
      %52 = arith.cmpi slt, %48, %51 : vector<16x1xi32>
      %53 = arith.andi %50, %52 : vector<16x1xi1>
      %c0_28 = arith.constant 0 : index
      %c0_29 = arith.constant 0 : index
      %54 = vector.load %arg7[%c0_28, %c0_29] : memref<16x1xf32, #tpu.memory_space<vmem>>, vector<16x1xf32>
      %55 = arith.subf %44, %54 : vector<16x1xf32>
      %cst_30 = arith.constant 0.000000e+00 : f32
      %56 = vector.broadcast %cst_30 : f32 to vector<16x1xf32>
      %57 = arith.select %53, %55, %56 : vector<16x1xi1>, vector<16x1xf32>
      %c0_31 = arith.constant 0 : index
      %c0_32 = arith.constant 0 : index
      %58 = vector.load %arg4[%c0_31, %c0_32] : memref<16x1xf32, #tpu.memory_space<vmem>>, vector<16x1xf32>
      tpu.vector_store %arg4[%c0_31, %c0_32], %57 {strides = array<i32>} : memref<16x1xf32, #tpu.memory_space<vmem>>, vector<16x1xf32>,
    } else {
    }
    return
  }
  func.func @transform_0(%arg0: i32, %arg1: i32) -> (i32, i32) {
    %c0_i32 = arith.constant 0 : i32
    return %arg0, %arg1 : i32, i32
  }
  func.func @transform_1(%arg0: i32, %arg1: i32) -> (i32, i32) {
    %c0_i32 = arith.constant 0 : i32
    %c0_i32_0 = arith.constant 0 : i32
    return %arg0, %c0_i32 : i32, i32
  }
  func.func @transform_2(%arg0: i32, %arg1: i32) -> (i32, i32) {
    %c0_i32 = arith.constant 0 : i32
    %c0_i32_0 = arith.constant 0 : i32
    return %arg0, %c0_i32 : i32, i32
  }
}

</mosaic_0001>

<llo_original>
// kernel: tpu_custom_call.1
$region0: #{tpu_custom_call.1}
  #allocation0 [shape = 'u32[]', space=smem, size = 0x4, offset = 0x4, fixed_abs, tag = 'smem constant byte address 0x4 - core index']
  #allocation1 [shape = 'u32[144,128]{1,0:T(1,128)}', space=vmem, size = 0x12000, scoped, tag = 'internal scratch']
  #allocation2 [shape = 'f32[16,1]{1,0:T(8,128)}', space=vmem, size = 0x2000, scoped, tag = 'scratch operand']
  #allocation3 [shape = 'f32[16,1]{1,0:T(8,128)}', space=vmem, size = 0x2000, scoped, tag = 'scratch operand']
  #allocation4 [shape = 'f32[16,1]{1,0:T(8,128)}', space=vmem, size = 0x2000, scoped, tag = 'scratch operand']
  %s0 = inlined_call_operand.vmem [shape: f32[16,10], index: 0, kind: input, shape index: {}]
  %s1 = inlined_call_operand.vmem [shape: s32[16,1], index: 1, kind: input, shape index: {}]
  %s2 = inlined_call_operand.vmem [shape: f32[16,1], index: 2, kind: output, shape index: {}]
  %s3 = sld [smem:[#allocation0]]
  $region26: #{tpu_custom_call.1} parent=0
    _
  %s5 = ssub.s32 1, %s3
  %s6 = scalar_select 0, %s5, %s3
  // Predicated region
  $region2: #{tpu_custom_call.1} parent=0 // pred_check
    _
  $region3: #{tpu_custom_call.1} parent=0 // pred_check_branch
    %8 = sbr.rel (0) target = $region5
  $region4: #{tpu_custom_call.1} parent=0 // pred_region
    _
  $region5: #{tpu_custom_call.1} parent=0 // pred_fallthru
    _
  // Predicated region
  $region6: #{tpu_custom_call.1} parent=0 // pred_check
    _
  $region7: #{tpu_custom_call.1} parent=0 // pred_check_branch
    %10 = sbr.rel (0) target = $region9
  $region8: #{tpu_custom_call.1} parent=0 // pred_region
    _
  $region9: #{tpu_custom_call.1} parent=0 // pred_fallthru
    _
  %p11 = scmp.eq.s32.totalorder 0, 0
  // Predicated region
  $region10: #{tpu_custom_call.1} parent=0 // pred_check
    %p12 = pneg %p11
  $region11: #{tpu_custom_call.1} parent=0 // pred_check_branch
    %14 = sbr.rel (%p12) target = $region13
  $region12: #{tpu_custom_call.1} parent=0 // pred_region
    %vm15 = vcmask 7168
    %16 = vst.msk [vmem:[#allocation2] sm:$0xff] %vm15, -inf
    %17 = vst.msk [vmem:[#allocation2 + $0x8] sm:$0xff] %vm15, -inf
    %18 = vst.msk [vmem:[#allocation3] sm:$0xff] %vm15, 0.0
    %19 = vst.msk [vmem:[#allocation3 + $0x8] sm:$0xff] %vm15, 0.0
    %20 = vst.msk [vmem:[#allocation4] sm:$0xff] %vm15, 0.0
    %21 = vst.msk [vmem:[#allocation4 + $0x8] sm:$0xff] %vm15, 0.0
  $region13: #{tpu_custom_call.1} parent=0 // pred_fallthru
    _
  %v22 = vld [vmem:[%s0] sm:$0xff]
  %v23 = vld [vmem:[%s0 + $0x8] sm:$0xff]
  %s24 = smul.u32 0, 128
  %v25 = vlaneseq
  %v26 = vand.u32 %v25, 127
  %v27 = vstv %s24
  %v28 = vadd.s32 %v27, %v26
  %vm29 = vcmp.lt.s32.totalorder %v28, 10
  %v30 = vsel %vm29, %v22, -1e+30
  %v31 = vsel %vm29, %v23, -1e+30
  %v32 = vld [vmem:[%s1] sm:$0xff]
  %v33 = vld [vmem:[%s1 + $0x8] sm:$0xff]
  %v34 = vld [vmem:[#allocation4] sm:$0xff]
  %v35 = vld [vmem:[#allocation4 + $0x8] sm:$0xff]
  %36 = vset.pattern.permute.xlu0 0
  %37 = vperm.xlu0 %36, %v32
  %v38 = vpop.permute.xlu0 %37
  %39 = vset.pattern.permute.xlu0 0
  %40 = vperm.xlu0 %39, %v33
  %v41 = vpop.permute.xlu0 %40
  %vm42 = vcmp.eq.s32.totalorder %v28, %v38
  %vm43 = vcmp.eq.s32.totalorder %v28, %v41
  %v44 = vsel %vm42, %v30, 0.0
  %v45 = vsel %vm43, %v31, 0.0
  %46 = vadd.xlane.f32.xlu0 %v44
  %v47 = vpop.xlane.xlu0 %46
  %48 = vadd.xlane.f32.xlu0 %v45
  %v49 = vpop.xlane.xlu0 %48
  %v50 = vadd.f32 %v34, %v47
  %v51 = vadd.f32 %v35, %v49
  %vm52 = vcmask 7168
  %53 = vst.msk [vmem:[#allocation4] sm:$0xff] %vm52, %v50
  %54 = vst.msk [vmem:[#allocation4 + $0x8] sm:$0xff] %vm52, %v51
  %v55 = vld [vmem:[#allocation2] sm:$0xff]
  %v56 = vld [vmem:[#allocation2 + $0x8] sm:$0xff]
  %57 = vmax.xlane.f32.xlu0 %v30
  %v58 = vpop.xlane.xlu0 %57
  %59 = vmax.xlane.f32.xlu0 %v31
  %v60 = vpop.xlane.xlu0 %59
  %v61 = vmax.f32 %v55, %v58
  %v62 = vmax.f32 %v56, %v60
  %v63 = vld [vmem:[#allocation3] sm:$0xff]
  %v64 = vld [vmem:[#allocation3 + $0x8] sm:$0xff]
  %v65 = vsub.f32 %v55, %v61
  %v66 = vsub.f32 %v56, %v62
  %v67 = vmul.f32 %v65, 1.442695
  %v68 = vpow.pop %v67
  %v69 = vmul.f32 %v66, 1.442695
  %v70 = vpow.pop %v69
  %v71 = vmul.f32 %v63, %v68
  %v72 = vmul.f32 %v64, %v70
  %74 = vset.pattern.permute.xlu0 0
  %75 = vperm.xlu0 %74, %v61
  %v76 = vpop.permute.xlu0 %75
  %79 = vset.pattern.permute.xlu0 0
  %80 = vperm.xlu0 %79, %v62
  %v81 = vpop.permute.xlu0 %80
  %v83 = vsub.f32 %v30, %v76
  %v84 = vsub.f32 %v31, %v81
  %v85 = vmul.f32 %v83, 1.442695
  %v86 = vpow.pop %v85
  %v87 = vmul.f32 %v84, 1.442695
  %v88 = vpow.pop %v87
  %89 = vadd.xlane.f32.xlu0 %v86
  %v90 = vpop.xlane.xlu0 %89
  %91 = vadd.xlane.f32.xlu0 %v88
  %v92 = vpop.xlane.xlu0 %91
  %v93 = vadd.f32 %v71, %v90
  %v94 = vadd.f32 %v72, %v92
  %95 = vst.msk [vmem:[#allocation3] sm:$0xff] %vm52, %v93
  %96 = vst.msk [vmem:[#allocation3 + $0x8] sm:$0xff] %vm52, %v94
  %97 = vst.msk [vmem:[#allocation2] sm:$0xff] %vm52, %v61
  %98 = vst.msk [vmem:[#allocation2 + $0x8] sm:$0xff] %vm52, %v62
  // Predicated region
  $region14: #{tpu_custom_call.1} parent=0 // pred_check
    %p99 = pneg %p11
  $region15: #{tpu_custom_call.1} parent=0 // pred_check_branch
    %101 = sbr.rel (%p99) target = $region17
  $region16: #{tpu_custom_call.1} parent=0 // pred_region
    %v102 = vld [vmem:[#allocation2] sm:$0xff]
    %v103 = vld [vmem:[#allocation2 + $0x8] sm:$0xff]
    %v104 = vld [vmem:[#allocation3] sm:$0xff]
    %v105 = vld [vmem:[#allocation3 + $0x8] sm:$0xff]
    %v106 = vlog2.pop %v104
    %v107 = vmul.f32 %v106, 0.6931472
    %v108 = vlog2.pop %v105
    %v109 = vmul.f32 %v108, 0.6931472
    %v110 = vadd.f32 %v102, %v107
    %v111 = vadd.f32 %v103, %v109
    %s112 = smul.u32 0, 16
    %v113 = vlaneseq
    %v114 = vshrl.u32 %v113, 7
    %v115 = vadd.s32 %v114, 8
    %v116 = vstv %s112
    %v117 = vadd.s32 %v116, %v114
    %v118 = vadd.s32 %v116, %v115
    %vm119 = vcmp.ge.s32.totalorder %v32, 0
    %vm120 = vcmp.ge.s32.totalorder %v33, 0
    %vm121 = vcmp.lt.s32.totalorder %v117, 16
    %vm122 = vcmp.lt.s32.totalorder %v118, 16
    %vm123 = vmand %vm119, %vm121
    %vm124 = vmand %vm120, %vm122
    %v125 = vld [vmem:[#allocation4] sm:$0xff]
    %v126 = vld [vmem:[#allocation4 + $0x8] sm:$0xff]
    %v127 = vsub.f32 %v110, %v125
    %v128 = vsub.f32 %v111, %v126
    %v129 = vsel %vm123, %v127, 0.0
    %v130 = vsel %vm124, %v128, 0.0
    %131 = vst.msk [vmem:[%s2] sm:$0xff] %vm52, %v129
    %132 = vst.msk [vmem:[%s2 + $0x8] sm:$0xff] %vm52, %v130
  $region17: #{tpu_custom_call.1} parent=0 // pred_fallthru
    _
  // Predicated region
  $region18: #{tpu_custom_call.1} parent=0 // pred_check
    _
  $region19: #{tpu_custom_call.1} parent=0 // pred_check_branch
    %134 = sbr.rel (0) target = $region21
  $region20: #{tpu_custom_call.1} parent=0 // pred_region
    _
  $region21: #{tpu_custom_call.1} parent=0 // pred_fallthru
    _
  // Predicated region
  $region22: #{tpu_custom_call.1} parent=0 // pred_check
    _
  $region23: #{tpu_custom_call.1} parent=0 // pred_check_branch
    %136 = sbr.rel (0) target = $region25
  $region24: #{tpu_custom_call.1} parent=0 // pred_region
    _
  $region25: #{tpu_custom_call.1} parent=0 // pred_fallthru
    _

</llo_original>
